<compile_context>
chip_gen: v5e
topology: v5e:2x2
jax: 0.10.0
libtpu: 0.0.40
codegen_flags: <defaults>
</compile_context>

<pallas_src>
import functools

import jax
import jax.numpy as jnp
from jax.experimental import pallas as pl
from jax.experimental.pallas import tpu as pltpu


def _round_up(x, m):
    return ((x + m - 1) // m) * m


def _pred_count_kernel(out_ref, cnt_ref, acc_ref, *, n_rows):
    """Accumulates per-class counts of row-wise argmax over this slice's tiles."""
    i = pl.program_id(1)                              # row tile within the slice

    @pl.when(i == 0)
    def _init():
        acc_ref[...] = jnp.zeros_like(acc_ref)

    x = out_ref[...]                                  # (tile_n, C), native dtype
    tn, num_classes = x.shape

    col = jax.lax.broadcasted_iota(jnp.int32, (tn, num_classes), 1)
    row = jax.lax.broadcasted_iota(jnp.int32, (tn, 1), 0)

    # Rows past the real batch (ragged last tile / phantom tile of an odd
    # split) are masked via program ids, not data, so clamped block re-reads
    # of arbitrary pad data contribute nothing.
    start = (pl.program_id(0) * pl.num_programs(1) + i) * tn
    valid = (start + row) < n_rows                    # (tile_n, 1) bool

    # First-occurrence argmax along the class axis (matches torch.argmax),
    # computed in the source dtype (ordering unchanged).
    # TODO(synk): an all-NaN row yields no count here, whereas torch.argmax
    # returns the NaN position; behavior differs only on NaN inputs.
    row_max = jnp.max(x, axis=1, keepdims=True)                       # (tile_n, 1)
    idx = jnp.min(jnp.where(x == row_max, col, num_classes),
                  axis=1, keepdims=True)                              # (tile_n, 1)
    idx = jnp.where(valid, idx, num_classes)          # fold mask into scalar column

    pred_oh = (col == idx).astype(jnp.int32)          # (tile_n, C) one-hot

    # Reduce only down to 8 sublane rows per step: plain vreg adds, no
    # per-step cross-sublane XLU reduction.
    acc_ref[...] += jnp.sum(pred_oh.reshape(tn // 8, 8, num_classes), axis=0)

    @pl.when(i == pl.num_programs(1) - 1)
    def _finalize():
        cnt_ref[...] = jnp.sum(acc_ref[...], axis=0, keepdims=True)   # (1, C)


def accuracy(output, target, *, tile_n=None):
    """output: (N, C) float (any dtype); target: (N, 1) int. Returns scalar f32."""
    output = jnp.asarray(output)
    N, C = output.shape
    target = jnp.asarray(target).reshape(-1).astype(jnp.int32)        # (N,)

    itemsize = jnp.dtype(output.dtype).itemsize
    if tile_n is None:
        # Size the row tile from a total-VMEM budget safe on every generation
        # (v7x: 64 MiB physical / 32 MiB scoped default):
        #   double-buffered input block (2 * itemsize B/elem)
        # + ~3-4 full-tile int32 temporaries (iota / compare / one-hot,
        #   ~16 B/elem) materialized by the compiler.
        vmem_budget = 40 * 1024 * 1024
        bytes_per_row = C * (2 * itemsize + 16)
        rows_budget = max(8, ((vmem_budget // bytes_per_row) // 8) * 8)
        tile_n = min(_round_up(N, 8), rows_budget)
    else:
        tile_n = min(_round_up(max(tile_n, 8), 8), _round_up(N, 8))

    tiles = pl.cdiv(N, tile_n)
    # Unconditional 2-way split over the leading "parallel" grid axis so both
    # v7x TensorCores always get work (no-op on single-core v5e/v6e).  An odd
    # tile count produces one phantom tile, neutralized by the clamped
    # index_map + the in-kernel row mask.
    num_slices = 2 if tiles >= 2 else 1
    tiles_per_slice = pl.cdiv(tiles, num_slices)

    kernel = functools.partial(_pred_count_kernel, n_rows=N)

    in_map = lambda s, i: (jnp.minimum(s * tiles_per_slice + i, tiles - 1), 0)
    out_map = lambda s, i: (s, 0, 0)

    cnt_pred = pl.pallas_call(
        kernel,
        out_shape=jax.ShapeDtypeStruct((num_slices, 1, C), jnp.int32),
        grid=(num_slices, tiles_per_slice),
        in_specs=[pl.BlockSpec((tile_n, C), in_map)],     # model output, native dtype
        out_specs=pl.BlockSpec((None, 1, C), out_map),    # per-slice pred counts
        scratch_shapes=[pltpu.VMEM((8, C), jnp.int32)],
        compiler_params=pltpu.CompilerParams(
            dimension_semantics=("parallel", "arbitrary"),
            vmem_limit_bytes=48 * 1024 * 1024),
    )(output)

    # Tiny wrapper-side finalize, all in exact integer arithmetic.
    cnt_pred = jnp.sum(cnt_pred, axis=(0, 1))                          # (C,) int32
    cnt_tgt = jnp.zeros((C,), jnp.int32).at[target].add(1)             # (C,) int32

    # sum_{i,j}[pred[j] == target[i]] == dot(cnt_pred, cnt_tgt); keep it exact:
    # int64 when x64 is enabled, else int32 (exact for N <= 46340 since the
    # total is bounded by N^2).  Single f32 rounding happens only at the end.
    acc_dtype = jax.dtypes.canonicalize_dtype(jnp.int64)
    total = jnp.sum(cnt_pred.astype(acc_dtype) * cnt_tgt.astype(acc_dtype))
    return total.astype(jnp.float32) / jnp.float32(N * N)


if __name__ == "__main__":
    key = jax.random.PRNGKey(0)
    k_out, k_tgt = jax.random.split(key)

    # Small shapes consistent with the module: batch N=8, classes C=32.
    N, C = 8, 32
    output = jax.random.normal(k_out, (N, C), dtype=jnp.float32)
    target = jax.random.randint(k_tgt, (N, 1), 0, C, dtype=jnp.int32)

    metric = jax.block_until_ready(accuracy(output, target))

    # Pure-JAX reference reproducing the exact PyTorch broadcast semantics.
    pred = jnp.argmax(output, axis=1)                      # (N,)
    ref = jnp.mean((pred == target).astype(jnp.float32))   # (N,) vs (N,1) -> (N,N)
    assert jnp.allclose(metric, ref, atol=1e-6), (metric, ref)

    # Exercise the gridded / 2-slice / ragged + phantom-tile path
    # (N=33, tile_n=8 -> 5 real tiles -> 2x3 grid with one phantom tile).
    N2, C2 = 33, 16
    out2 = jax.random.normal(k_out, (N2, C2), dtype=jnp.bfloat16)
    tgt2 = jax.random.randint(k_tgt, (N2, 1), 0, C2, dtype=jnp.int32)
    metric2 = jax.block_until_ready(accuracy(out2, tgt2, tile_n=8))
    pred2 = jnp.argmax(out2, axis=1)
    ref2 = jnp.mean((pred2 == tgt2).astype(jnp.float32))
    assert jnp.allclose(metric2, ref2, atol=1e-6), (metric2, ref2)

    # Default (auto-tiled, single partial block) path on a non-multiple-of-8 batch.
    N3, C3 = 20, 10
    out3 = jax.random.normal(k_tgt, (N3, C3), dtype=jnp.float32)
    tgt3 = jax.random.randint(k_out, (N3, 1), 0, C3, dtype=jnp.int32)
    metric3 = jax.block_until_ready(accuracy(out3, tgt3))
    pred3 = jnp.argmax(out3, axis=1)
    ref3 = jnp.mean((pred3 == tgt3).astype(jnp.float32))
    assert jnp.allclose(metric3, ref3, atol=1e-6), (metric3, ref3)

    print("KERNEL_OK")
</pallas_src>

<mosaic_0001>
module attributes {stable_mosaic.version = 11 : i64} {
  func.func @_pred_count_kernel(%arg0: i32, %arg1: i32, %arg2: memref<8x32xf32, #tpu.memory_space<vmem>>, %arg3: memref<1x1x32xi32, #tpu.memory_space<vmem>>, %arg4: memref<8x32xi32, #tpu.memory_space<vmem>>) attributes {dimension_semantics = [#tpu.dimension_semantics<parallel>, #tpu.dimension_semantics<arbitrary>], iteration_bounds = array<i64: 1, 1>, scalar_prefetch = 0 : i64, scratch_operands = 1 : i64, tpu.core_type = #tpu.core_type<tc>, window_params = [{transform_indices = @transform_0, window_bounds = array<i64: 8, 32>}, {transform_indices = @transform_1, window_bounds = array<i64: 1, 1, 32>}]} {
    %c0_i32 = arith.constant 0 : i32
    %0 = arith.cmpi eq, %arg1, %c0_i32 : i32
    %1 = arith.extui %0 : i1 to i32
    %c0_i32_0 = arith.constant 0 : i32
    %2 = arith.cmpi ne, %1, %c0_i32_0 : i32
    scf.if %2 {
      %c0_i32_12 = arith.constant 0 : i32
      %34 = vector.broadcast %c0_i32_12 : i32 to vector<8x32xi32>
      %c0_13 = arith.constant 0 : index
      %c0_14 = arith.constant 0 : index
      %35 = vector.load %arg4[%c0_13, %c0_14] : memref<8x32xi32, #tpu.memory_space<vmem>>, vector<8x32xi32>
      tpu.vector_store %arg4[%c0_13, %c0_14], %34 {strides = array<i32>} : memref<8x32xi32, #tpu.memory_space<vmem>>, vector<8x32xi32>,
    } else {
    }
    %c0 = arith.constant 0 : index
    %c0_1 = arith.constant 0 : index
    %3 = vector.load %arg2[%c0, %c0_1] : memref<8x32xf32, #tpu.memory_space<vmem>>, vector<8x32xf32>
    %4 = tpu.iota {dimensions = array<i32: 1>} : vector<8x32xi32>
    %5 = tpu.iota {dimensions = array<i32: 0>} : vector<8x1xi32>
    %c1_i32 = arith.constant 1 : i32
    %6 = arith.muli %arg0, %c1_i32 : i32
    %7 = arith.addi %6, %arg1 : i32
    %c8_i32 = arith.constant 8 : i32
    %8 = arith.muli %7, %c8_i32 : i32
    %9 = vector.broadcast %8 : i32 to vector<8x1xi32>
    %10 = arith.addi %9, %5 : vector<8x1xi32>
    %c8_i32_2 = arith.constant 8 : i32
    %11 = vector.broadcast %c8_i32_2 : i32 to vector<8x1xi32>
    %12 = arith.cmpi slt, %10, %11 : vector<8x1xi32>
    %cst = arith.constant dense<0xFF800000> : vector<8xf32>
    %13 = vector.multi_reduction <maximumf>, %3, %cst [1] : vector<8x32xf32> to vector<8xf32>
    %14 = vector.shape_cast %13 : vector<8xf32> to vector<8x1xf32>
    %15 = vector.broadcast %14 : vector<8x1xf32> to vector<8x32xf32>
    %16 = arith.cmpf oeq, %3, %15 : vector<8x32xf32>
    %c32_i32 = arith.constant 32 : i32
    %17 = vector.broadcast %c32_i32 : i32 to vector<8x32xi32>
    %18 = arith.select %16, %4, %17 : vector<8x32xi1>, vector<8x32xi32>
    %cst_3 = arith.constant dense<2147483647> : vector<8xi32>
    %19 = vector.multi_reduction <minsi>, %18, %cst_3 [1] : vector<8x32xi32> to vector<8xi32>
    %20 = vector.shape_cast %19 : vector<8xi32> to vector<8x1xi32>
    %c32_i32_4 = arith.constant 32 : i32
    %21 = vector.broadcast %c32_i32_4 : i32 to vector<8x1xi32>
    %22 = arith.select %12, %20, %21 : vector<8x1xi1>, vector<8x1xi32>
    %23 = vector.broadcast %22 : vector<8x1xi32> to vector<8x32xi32>
    %24 = arith.cmpi eq, %4, %23 : vector<8x32xi32>
    %25 = arith.extui %24 : vector<8x32xi1> to vector<8x32xi32>
    %c0_5 = arith.constant 0 : index
    %c0_6 = arith.constant 0 : index
    %26 = vector.load %arg4[%c0_5, %c0_6] : memref<8x32xi32, #tpu.memory_space<vmem>>, vector<8x32xi32>
    %27 = vector.shape_cast %25 : vector<8x32xi32> to vector<1x8x32xi32>
    %cst_7 = arith.constant dense<0> : vector<8x32xi32>
    %28 = vector.multi_reduction <add>, %27, %cst_7 [0] : vector<1x8x32xi32> to vector<8x32xi32>
    %29 = arith.addi %26, %28 : vector<8x32xi32>
    %c0_8 = arith.constant 0 : index
    %c0_9 = arith.constant 0 : index
    %30 = vector.load %arg4[%c0_8, %c0_9] : memref<8x32xi32, #tpu.memory_space<vmem>>, vector<8x32xi32>
    tpu.vector_store %arg4[%c0_8, %c0_9], %29 {strides = array<i32>} : memref<8x32xi32, #tpu.memory_space<vmem>>, vector<8x32xi32>,
    %c0_i32_10 = arith.constant 0 : i32
    %31 = arith.cmpi eq, %arg1, %c0_i32_10 : i32
    %32 = arith.extui %31 : i1 to i32
    %c0_i32_11 = arith.constant 0 : i32
    %33 = arith.cmpi ne, %32, %c0_i32_11 : i32
    scf.if %33 {
      %c0_12 = arith.constant 0 : index
      %c0_13 = arith.constant 0 : index
      %34 = vector.load %arg4[%c0_12, %c0_13] : memref<8x32xi32, #tpu.memory_space<vmem>>, vector<8x32xi32>
      %cst_14 = arith.constant dense<0> : vector<32xi32>
      %35 = vector.multi_reduction <add>, %34, %cst_14 [0] : vector<8x32xi32> to vector<32xi32>
      %36 = vector.shape_cast %35 : vector<32xi32> to vector<1x32xi32>
      %c0_15 = arith.constant 0 : index
      %c0_16 = arith.constant 0 : index
      %c0_17 = arith.constant 0 : index
      %37 = vector.load %arg3[%c0_15, %c0_16, %c0_17] : memref<1x1x32xi32, #tpu.memory_space<vmem>>, vector<1x1x32xi32>
      %38 = vector.shape_cast %37 : vector<1x1x32xi32> to vector<1x32xi32>
      %39 = vector.shape_cast %36 : vector<1x32xi32> to vector<1x1x32xi32>
      tpu.vector_store %arg3[%c0_15, %c0_16, %c0_17], %39 {strides = array<i32>} : memref<1x1x32xi32, #tpu.memory_space<vmem>>, vector<1x1x32xi32>,
    } else {
    }
    return
  }
  func.func @transform_0(%arg0: i32, %arg1: i32) -> (i32, i32) {
    %c1_i32 = arith.constant 1 : i32
    %0 = arith.muli %arg0, %c1_i32 : i32
    %1 = arith.addi %0, %arg1 : i32
    %c0_i32 = arith.constant 0 : i32
    %2 = arith.minsi %1, %c0_i32 : i32
    %c0_i32_0 = arith.constant 0 : i32
    %c0_i32_1 = arith.constant 0 : i32
    return %2, %c0_i32_0 : i32, i32
  }
  func.func @transform_1(%arg0: i32, %arg1: i32) -> (i32, i32, i32) {
    %c0_i32 = arith.constant 0 : i32
    %c0_i32_0 = arith.constant 0 : i32
    %c0_i32_1 = arith.constant 0 : i32
    return %arg0, %c0_i32, %c0_i32_0 : i32, i32, i32
  }
}

</mosaic_0001>

<llo_original>
// kernel: tpu_custom_call.1
$region0: #{tpu_custom_call.1}
  #allocation0 [shape = 'u32[]', space=smem, size = 0x4, offset = 0x4, fixed_abs, tag = 'smem constant byte address 0x4 - core index']
  #allocation1 [shape = 'u32[72,128]{1,0:T(1,128)}', space=vmem, size = 0x9000, scoped, tag = 'internal scratch']
  #allocation2 [shape = 's32[8,32]{1,0:T(8,128)}', space=vmem, size = 0x1000, scoped, tag = 'scratch operand']
  %s0 = inlined_call_operand.hbm [shape: f32[8,32], index: 0, kind: input, shape index: {}]
  %s1 = inlined_call_operand.hbm [shape: s32[1,1,32], index: 1, kind: output, shape index: {}]
  %s2 = sld [smem:[#allocation0]]
  $region26: #{tpu_custom_call.1} parent=0
    _
  %s4 = ssub.s32 1, %s2
  %s5 = scalar_select 0, %s4, %s2
  $region1: #{tpu_custom_call.1} parent=0
    #allocation3 [shape = 'u8[4096]{0}', space=vmem, size = 0x1000, scoped, tag = 'input window, operand 0, single buffered']
    #allocation4 [shape = 's32[1]{0}', space=sflag, size = 0x4, scoped, tag = 'scoped memory for tpu_custom_call.1']
    #allocation5 [shape = 's32[1]{0}', space=sflag, size = 0x4, scoped, tag = 'scoped memory for tpu_custom_call.1']
    #allocation6 [shape = 'u8[512]{0}', space=vmem, size = 0x400, scoped, tag = 'output window, operand 0, single buffered']
    %6 = vsyncpa [#allocation4], 0
    %7 = vsyncpa [#allocation5], 0
    // Predicated region
    $region2: #{tpu_custom_call.1} parent=1 // pred_check
      _
    $region3: #{tpu_custom_call.1} parent=1 // pred_check_branch
      %9 = sbr.rel (0) target = $region5
    $region4: #{tpu_custom_call.1} parent=1 // pred_region
      %s10 = sadd.s32 0, 0
      %p11 = scmp.lt.s32.totalorder %s10, 0
      %s12 = scalar_select %p11, %s10, 0
      %14 = vsyncadd [#allocation4], 0
      %s15 = smul.addr %s12, 8
      %s16 = scalar_lea.hbm %s0, %s15
      %s18 = sshll.u32 %s16, 4
      %s19 = int_to_ptr.hbm [resolvable:$true] %s18
      %s20 = sshll.u32 [#allocation3], 4
      %s21 = int_to_ptr.vmem [resolvable:$true] %s20
      %23 = dma.hbm_to_vmem [thread:$0]  %s19, 128, %s21, [#allocation4]
    $region5: #{tpu_custom_call.1} parent=1 // pred_fallthru
      _
    // Predicated region
    $region6: #{tpu_custom_call.1} parent=1 // pred_check
      _
    $region7: #{tpu_custom_call.1} parent=1 // pred_check_branch
      %25 = sbr.rel (0) target = $region9
    $region8: #{tpu_custom_call.1} parent=1 // pred_region
      %27 = dma.done [#allocation4], 128
    $region9: #{tpu_custom_call.1} parent=1 // pred_fallthru
      _
    %s28 = sadd.s32 0, 0
    %p29 = scmp.lt.s32.totalorder %s28, 0
    %s30 = scalar_select %p29, %s28, 0
    %p31 = scmp.eq.s32.totalorder 0, 0
    // Predicated region
    $region10: #{tpu_custom_call.1} parent=1 // pred_check
      %p32 = pneg %p31
    $region11: #{tpu_custom_call.1} parent=1 // pred_check_branch
      %34 = sbr.rel (%p32) target = $region13
    $region12: #{tpu_custom_call.1} parent=1 // pred_region
      %vm35 = vcmask 261120
      %36 = vst.msk [vmem:[#allocation2] sm:$0xff] %vm35, 0
    $region13: #{tpu_custom_call.1} parent=1 // pred_fallthru
      _
    %v37 = vld [vmem:[#allocation3] sm:$0xff]
    %v38 = vlaneseq
    %v39 = vand.u32 %v38, 127
    %v40 = vlaneseq
    %v41 = vshrl.u32 %v40, 7
    %s42 = sadd.s32 0, 0
    %s43 = smul.u32 %s42, 8
    %v44 = vstv %s43
    %v45 = vadd.s32 %v44, %v41
    %vm46 = vcmp.lt.s32.totalorder %v45, 8
    %vm47 = vcmask 261120
    %v48 = vsel %vm47, %v37, -inf
    %49 = vmax.xlane.f32.xlu0 %v48
    %v50 = vpop.xlane.xlu0 %49
    %vm51 = vcmp.eq.f32.partialorder %v37, %v50
    %v52 = vsel %vm51, %v39, 32
    %v53 = vsel %vm47, %v52, 2147483647
    %v54 = vand.u32 %v53, 65535
    %v55 = vshra.s32 %v53, 16
    %v56 = vcvt.s32.f32 %v54
    %v57 = vcvt.s32.f32 %v55
    %58 = vmin.xlane.f32.xlu0 %v57
    %v59 = vpop.xlane.xlu0 %58
    %vm60 = vcmp.eq.f32.partialorder %v57, %v59
    %v61 = vsel %vm60, %v56, inf
    %62 = vmin.xlane.f32.xlu0 %v61
    %v63 = vpop.xlane.xlu0 %62
    %v64 = vcvt.f32.s32 %v63
    %v65 = vcvt.f32.s32 %v59
    %v66 = vshll.u32 %v65, 16
    %v67 = vadd.s32 %v66, %v64
    %v68 = vsel %vm46, %v67, 32
    %vm69 = vcmp.eq.s32.totalorder %v39, %v68
    %v70 = vsel %vm69, 1, 0
    %v71 = vld [vmem:[#allocation2] sm:$0xff]
    %v72 = vadd.s32 %v71, %v70
    %73 = vst.msk [vmem:[#allocation2] sm:$0xff] %vm47, %v72
    // Predicated region
    $region14: #{tpu_custom_call.1} parent=1 // pred_check
      %p74 = pneg %p31
    $region15: #{tpu_custom_call.1} parent=1 // pred_check_branch
      %76 = sbr.rel (%p74) target = $region17
    $region16: #{tpu_custom_call.1} parent=1 // pred_region
      %v77 = vld [vmem:[#allocation2] sm:$0xff]
      %v78 = vsel %vm47, %v77, 0
      %v79 = vrot.slane %v78, 4
      %v80 = vadd.s32 %v78, %v79
      %v81 = vrot.slane %v80, 2
      %v82 = vadd.s32 %v80, %v81
      %v83 = vrot.slane %v82, 1
      %v84 = vadd.s32 %v82, %v83
      %vm85 = vcmask 253952
      %86 = vst.msk [vmem:[#allocation6] sm:$0x1] %vm85, %v84
    $region17: #{tpu_custom_call.1} parent=1 // pred_fallthru
      _
    // Predicated region
    $region18: #{tpu_custom_call.1} parent=1 // pred_check
      _
    $region19: #{tpu_custom_call.1} parent=1 // pred_check_branch
      %88 = sbr.rel (0) target = $region21
    $region20: #{tpu_custom_call.1} parent=1 // pred_region
      %90 = vsyncadd [#allocation5], 0
      %s92 = sshll.u32 [#allocation6], 4
      %s93 = int_to_ptr.vmem [resolvable:$true] %s92
      %s94 = sshll.u32 %s1, 4
      %s95 = int_to_ptr.hbm [resolvable:$true] %s94
      %97 = dma.vmem_to_hbm [thread:$0]  %s93, 16, %s95, [#allocation5]
    $region21: #{tpu_custom_call.1} parent=1 // pred_fallthru
      _
    // Predicated region
    $region22: #{tpu_custom_call.1} parent=1 // pred_check
      _
    $region23: #{tpu_custom_call.1} parent=1 // pred_check_branch
      %99 = sbr.rel (0) target = $region25
    $region24: #{tpu_custom_call.1} parent=1 // pred_region
      %101 = dma.done [#allocation5], 16
    $region25: #{tpu_custom_call.1} parent=1 // pred_fallthru
      _
    %102 = vsyncpa [#allocation4], 1
    %103 = vsyncpa [#allocation5], 1

</llo_original>
